<compile_context>
chip_gen: v5e
topology: v5e:2x2
jax: 0.10.0
libtpu: 0.0.40
codegen_flags: <defaults>
</compile_context>

<pallas_src>
import math
import jax
import jax.numpy as jnp
from jax.experimental import pallas as pl
from jax.experimental.pallas import tpu as pltpu


def _sigmoid_approx(x):
    # sigmoid(x) = 1 / (1 + exp(-x)); reciprocal on the EUP (approx) slot.
    return pl.reciprocal(1.0 + jnp.exp(-x), approx=True)


def blstm_cell_kernel(xh_ref, w_ref, b_ref, cx_ref, hy_ref, cy_ref, acc_ref):
    # xh_ref: (tm, tk) bf16      w_ref: (tk, 4*Hc) bf16   b_ref: (1, 4*Hc) f32
    # cx_ref: (tm, Hc) f32       hy_ref/cy_ref: (tm, Hc)  acc_ref: (tm, 4*Hc) f32
    k = pl.program_id(2)

    # bf16 x bf16 -> f32 accumulate on the MXU.
    partial = jnp.dot(xh_ref[...], w_ref[...],
                      preferred_element_type=jnp.float32)

    @pl.when(k == 0)
    def _():
        acc_ref[...] = partial          # direct store: no zero-init round trip

    @pl.when(k > 0)
    def _():
        acc_ref[...] += partial

    @pl.when(k == pl.num_programs(2) - 1)
    def _():
        gates = acc_ref[...] + b_ref[...]          # (tm, 4*Hc), f32
        Hc = hy_ref.shape[1]
        i_g = _sigmoid_approx(gates[:, 0 * Hc:1 * Hc])
        f_g = _sigmoid_approx(gates[:, 1 * Hc:2 * Hc])
        g_g = jnp.tanh(gates[:, 2 * Hc:3 * Hc])
        o_g = _sigmoid_approx(gates[:, 3 * Hc:4 * Hc])
        cy = f_g * cx_ref[...] + i_g * g_g
        hy = o_g * jnp.tanh(cy)
        cy_ref[...] = cy.astype(cy_ref.dtype)
        hy_ref[...] = hy.astype(hy_ref.dtype)


def _round_up(x, m):
    return ((x + m - 1) // m) * m


def blstm_cell(x, hx, cx, W_ih, W_hh, bias_ih=None, bias_hh=None,
               *, binarize_input=False,
               tm_pref=256, tk_pref=1024, hc_pref=512):
    B, Din = x.shape
    H = hx.shape[1]
    assert W_ih.shape == (4 * H, Din)
    assert W_hh.shape == (4 * H, H)
    assert cx.shape == (B, H)

    if binarize_input:
        # Torch module binarizes only `input`, not hx.
        x = jnp.sign(x)

    # ---- hidden dim: pad per-gate to a lane-aligned multiple of 128 ----
    Hp = _round_up(H, 128)
    if Hp <= hc_pref:
        Hc = Hp
    else:
        Hc = hc_pref
        Hp = _round_up(Hp, Hc)
    NH = Hp // Hc
    G = 4 * Hc                       # lane-dense gate-block width per N tile

    # ---- batch tile ----
    Bp = _round_up(B, 8)
    if Bp <= tm_pref:
        tm = Bp
    else:
        tm = tm_pref
        Bp = _round_up(Bp, tm)

    # ---- weight prep (wrapper-side; cache/reuse across timesteps) ----
    # sign() == Binarize.apply forward; +-1/0 are exact in bf16.
    # NOTE: jnp.sign(0) == 0, matching torch.sign.
    w_ih = jnp.sign(W_ih).reshape(4, H, Din)
    w_hh = jnp.sign(W_hh).reshape(4, H, H)
    w_ih = jnp.pad(w_ih, ((0, 0), (0, Hp - H), (0, 0)))
    w_hh = jnp.pad(w_hh, ((0, 0), (0, Hp - H), (0, Hp - H)))
    w_cat = jnp.concatenate([w_ih, w_hh], axis=-1)            # (4, Hp, K0)
    K0 = Din + Hp
    w_t = jnp.transpose(w_cat, (2, 0, 1))                     # (K0, 4, Hp)
    # Interleave gate chunks: N-block n holds columns [i_n | f_n | g_n | o_n].
    w_t = w_t.reshape(K0, 4, NH, Hc).transpose(0, 2, 1, 3).reshape(K0, NH * G)

    Kp = _round_up(K0, 128)
    if Kp <= tk_pref:
        tk = Kp
    else:
        tk = tk_pref
        Kp = _round_up(Kp, tk)
    w_t = jnp.pad(w_t, ((0, Kp - K0), (0, 0))).astype(jnp.bfloat16)

    # ---- fused bias, padded and gate-chunk interleaved ----
    if bias_ih is None or bias_hh is None:
        bias = jnp.zeros((4, H), jnp.float32)
    else:
        bias = (bias_ih + bias_hh).astype(jnp.float32).reshape(4, H)
    bias = jnp.pad(bias, ((0, 0), (0, Hp - H)))
    bias = bias.reshape(4, NH, Hc).transpose(1, 0, 2).reshape(1, NH * G)

    # ---- activations ----
    hx_p = jnp.pad(hx, ((0, 0), (0, Hp - H)))
    xh = jnp.concatenate([x, hx_p], axis=1)                   # (B, K0)
    xh = jnp.pad(xh, ((0, Bp - B), (0, Kp - K0))).astype(jnp.bfloat16)
    cx_p = jnp.pad(cx, ((0, Bp - B), (0, Hp - H))).astype(jnp.float32)

    grid = (Bp // tm, NH, Kp // tk)
    out_dtype = cx.dtype

    # VMEM estimate (double-buffered inputs/outputs + f32 accumulator).
    vmem_bytes = (2 * tm * tk * 2          # xh (bf16)
                  + 2 * tk * G * 2         # weight (bf16)
                  + 2 * 1 * G * 4          # bias
                  + 2 * tm * Hc * 4        # cx
                  + 2 * 2 * tm * Hc * 4    # hy, cy
                  + tm * G * 4)            # accumulator
    vmem_limit = int(min(max(2 * vmem_bytes, 32 << 20), 64 << 20))

    cost = pl.CostEstimate(
        flops=2 * Bp * Kp * 4 * Hp + 10 * Bp * Hp,
        transcendentals=8 * Bp * Hp,
        bytes_accessed=2 * (Bp * Kp + Kp * 4 * Hp) + 4 * (4 * Hp + 3 * Bp * Hp),
    )

    hy_p, cy_p = pl.pallas_call(
        blstm_cell_kernel,
        out_shape=(jax.ShapeDtypeStruct((Bp, Hp), out_dtype),
                   jax.ShapeDtypeStruct((Bp, Hp), out_dtype)),
        grid=grid,
        in_specs=[
            pl.BlockSpec((tm, tk), lambda i, n, k: (i, k)),   # xh tile (bf16)
            pl.BlockSpec((tk, G), lambda i, n, k: (k, n)),    # weight tile (bf16)
            pl.BlockSpec((1, G), lambda i, n, k: (0, n)),     # fused bias
            pl.BlockSpec((tm, Hc), lambda i, n, k: (i, n)),   # cx tile
        ],
        out_specs=(pl.BlockSpec((tm, Hc), lambda i, n, k: (i, n)),
                   pl.BlockSpec((tm, Hc), lambda i, n, k: (i, n))),
        scratch_shapes=[pltpu.VMEM((tm, G), jnp.float32)],
        compiler_params=pltpu.CompilerParams(
            dimension_semantics=("parallel", "parallel", "arbitrary"),
            vmem_limit_bytes=vmem_limit),
        cost_estimate=cost,
    )(xh, w_t, bias, cx_p)

    return hy_p[:B, :H], cy_p[:B, :H]


if __name__ == "__main__":
    input_size, hidden_size, batch = 16, 32, 8

    key = jax.random.PRNGKey(0)
    kx, kh, kc, k1, k2, k3, k4 = jax.random.split(key, 7)
    stdv = 1.0 / math.sqrt(hidden_size)

    x = jax.random.normal(kx, (batch, input_size), jnp.float32)
    hx = jax.random.normal(kh, (batch, hidden_size), jnp.float32)
    cx = jax.random.normal(kc, (batch, hidden_size), jnp.float32)
    W_ih = jax.random.uniform(k1, (4 * hidden_size, input_size),
                              jnp.float32, -stdv, stdv)
    W_hh = jax.random.uniform(k2, (4 * hidden_size, hidden_size),
                              jnp.float32, -stdv, stdv)
    bias_ih = jax.random.uniform(k3, (4 * hidden_size,), jnp.float32, -stdv, stdv)
    bias_hh = jax.random.uniform(k4, (4 * hidden_size,), jnp.float32, -stdv, stdv)

    hy, cy = blstm_cell(x, hx, cx, W_ih, W_hh, bias_ih, bias_hh)
    jax.block_until_ready((hy, cy))

    # pure-JAX f32 reference (matches the PyTorch forward)
    gates = (x @ jnp.sign(W_ih).T + bias_ih) + (hx @ jnp.sign(W_hh).T + bias_hh)
    i_g, f_g, g_g, o_g = jnp.split(gates, 4, axis=1)
    i_g = jax.nn.sigmoid(i_g)
    f_g = jax.nn.sigmoid(f_g)
    g_g = jnp.tanh(g_g)
    o_g = jax.nn.sigmoid(o_g)
    cy_ref = f_g * cx + i_g * g_g
    hy_ref = o_g * jnp.tanh(cy_ref)

    assert hy.shape == (batch, hidden_size) and cy.shape == (batch, hidden_size)
    # Tolerance loosened vs. f32 reference: kernel feeds the MXU bf16 activations
    # (weights are exact +-1) and uses an approx-reciprocal sigmoid.
    assert jnp.allclose(cy, cy_ref, atol=5e-2, rtol=5e-2)
    assert jnp.allclose(hy, hy_ref, atol=5e-2, rtol=5e-2)

    print("KERNEL_OK")
</pallas_src>

<mosaic_0001>
module attributes {stable_mosaic.version = 11 : i64} {
  func.func @blstm_cell_kernel(%arg0: i32, %arg1: i32, %arg2: i32, %arg3: memref<8x256xbf16, #tpu.memory_space<vmem>>, %arg4: memref<256x512xbf16, #tpu.memory_space<vmem>>, %arg5: memref<1x512xf32, #tpu.memory_space<vmem>>, %arg6: memref<8x128xf32, #tpu.memory_space<vmem>>, %arg7: memref<8x128xf32, #tpu.memory_space<vmem>>, %arg8: memref<8x128xf32, #tpu.memory_space<vmem>>, %arg9: memref<8x512xf32, #tpu.memory_space<vmem>>) attributes {dimension_semantics = [#tpu.dimension_semantics<parallel>, #tpu.dimension_semantics<parallel>, #tpu.dimension_semantics<arbitrary>], iteration_bounds = array<i64: 1, 1, 1>, scalar_prefetch = 0 : i64, scratch_operands = 1 : i64, tpu.core_type = #tpu.core_type<tc>, window_params = [{transform_indices = @transform_0, window_bounds = array<i64: 8, 256>}, {transform_indices = @transform_1, window_bounds = array<i64: 256, 512>}, {transform_indices = @transform_2, window_bounds = array<i64: 1, 512>}, {transform_indices = @transform_3, window_bounds = array<i64: 8, 128>}, {transform_indices = @transform_4, window_bounds = array<i64: 8, 128>}, {transform_indices = @transform_5, window_bounds = array<i64: 8, 128>}]} {
    %c0 = arith.constant 0 : index
    %c0_0 = arith.constant 0 : index
    %0 = vector.load %arg3[%c0, %c0_0] : memref<8x256xbf16, #tpu.memory_space<vmem>>, vector<8x256xbf16>
    %c0_1 = arith.constant 0 : index
    %c0_2 = arith.constant 0 : index
    %1 = vector.load %arg4[%c0_1, %c0_2] : memref<256x512xbf16, #tpu.memory_space<vmem>>, vector<256x512xbf16>
    %cst = arith.constant dense<0.000000e+00> : vector<8x512xf32>
    %2 = tpu.matmul %0, %1, %cst {dimension_numbers = #tpu.dot_dimension_numbers<[1], [0], [0], [1], [0, 0, 1, 1], [], []>} : vector<8x256xbf16>, vector<256x512xbf16>, vector<8x512xf32> -> vector<8x512xf32>
    %c0_i32 = arith.constant 0 : i32
    %3 = arith.cmpi eq, %arg2, %c0_i32 : i32
    %4 = arith.extui %3 : i1 to i32
    %c0_i32_3 = arith.constant 0 : i32
    %5 = arith.cmpi ne, %4, %c0_i32_3 : i32
    scf.if %5 {
      %c0_8 = arith.constant 0 : index
      %c0_9 = arith.constant 0 : index
      %12 = vector.load %arg9[%c0_8, %c0_9] : memref<8x512xf32, #tpu.memory_space<vmem>>, vector<8x512xf32>
      tpu.vector_store %arg9[%c0_8, %c0_9], %2 {strides = array<i32>} : memref<8x512xf32, #tpu.memory_space<vmem>>, vector<8x512xf32>,
    } else {
    }
    %c0_i32_4 = arith.constant 0 : i32
    %6 = arith.cmpi sgt, %arg2, %c0_i32_4 : i32
    %7 = arith.extui %6 : i1 to i32
    %c0_i32_5 = arith.constant 0 : i32
    %8 = arith.cmpi ne, %7, %c0_i32_5 : i32
    scf.if %8 {
      %c0_8 = arith.constant 0 : index
      %c0_9 = arith.constant 0 : index
      %12 = vector.load %arg9[%c0_8, %c0_9] : memref<8x512xf32, #tpu.memory_space<vmem>>, vector<8x512xf32>
      %13 = arith.addf %12, %2 : vector<8x512xf32>
      %c0_10 = arith.constant 0 : index
      %c0_11 = arith.constant 0 : index
      %14 = vector.load %arg9[%c0_10, %c0_11] : memref<8x512xf32, #tpu.memory_space<vmem>>, vector<8x512xf32>
      tpu.vector_store %arg9[%c0_10, %c0_11], %13 {strides = array<i32>} : memref<8x512xf32, #tpu.memory_space<vmem>>, vector<8x512xf32>,
    } else {
    }
    %c0_i32_6 = arith.constant 0 : i32
    %9 = arith.cmpi eq, %arg2, %c0_i32_6 : i32
    %10 = arith.extui %9 : i1 to i32
    %c0_i32_7 = arith.constant 0 : i32
    %11 = arith.cmpi ne, %10, %c0_i32_7 : i32
    scf.if %11 {
      %c0_8 = arith.constant 0 : index
      %c0_9 = arith.constant 0 : index
      %12 = vector.load %arg9[%c0_8, %c0_9] : memref<8x512xf32, #tpu.memory_space<vmem>>, vector<8x512xf32>
      %c0_10 = arith.constant 0 : index
      %c0_11 = arith.constant 0 : index
      %13 = vector.load %arg5[%c0_10, %c0_11] : memref<1x512xf32, #tpu.memory_space<vmem>>, vector<1x512xf32>
      %14 = vector.broadcast %13 : vector<1x512xf32> to vector<8x512xf32>
      %15 = arith.addf %12, %14 : vector<8x512xf32>
      %16 = vector.extract_strided_slice %15 {offsets = [0, 0], sizes = [8, 128], strides = [1, 1]} : vector<8x512xf32> to vector<8x128xf32>
      %cst_12 = arith.constant 0.000000e+00 : f32
      %17 = vector.broadcast %cst_12 : f32 to vector<8x128xf32>
      %18 = arith.subf %17, %16 : vector<8x128xf32>
      %19 = math.exp %18 : vector<8x128xf32>
      %cst_13 = arith.constant 1.000000e+00 : f32
      %20 = vector.broadcast %cst_13 : f32 to vector<8x128xf32>
      %21 = arith.addf %20, %19 : vector<8x128xf32>
      %22 = tpu.reciprocal %21 {approx = true} : vector<8x128xf32> -> vector<8x128xf32>
      %23 = vector.extract_strided_slice %15 {offsets = [0, 128], sizes = [8, 128], strides = [1, 1]} : vector<8x512xf32> to vector<8x128xf32>
      %cst_14 = arith.constant 0.000000e+00 : f32
      %24 = vector.broadcast %cst_14 : f32 to vector<8x128xf32>
      %25 = arith.subf %24, %23 : vector<8x128xf32>
      %26 = math.exp %25 : vector<8x128xf32>
      %cst_15 = arith.constant 1.000000e+00 : f32
      %27 = vector.broadcast %cst_15 : f32 to vector<8x128xf32>
      %28 = arith.addf %27, %26 : vector<8x128xf32>
      %29 = tpu.reciprocal %28 {approx = true} : vector<8x128xf32> -> vector<8x128xf32>
      %30 = vector.extract_strided_slice %15 {offsets = [0, 256], sizes = [8, 128], strides = [1, 1]} : vector<8x512xf32> to vector<8x128xf32>
      %31 = math.tanh %30 : vector<8x128xf32>
      %32 = vector.extract_strided_slice %15 {offsets = [0, 384], sizes = [8, 128], strides = [1, 1]} : vector<8x512xf32> to vector<8x128xf32>
      %cst_16 = arith.constant 0.000000e+00 : f32
      %33 = vector.broadcast %cst_16 : f32 to vector<8x128xf32>
      %34 = arith.subf %33, %32 : vector<8x128xf32>
      %35 = math.exp %34 : vector<8x128xf32>
      %cst_17 = arith.constant 1.000000e+00 : f32
      %36 = vector.broadcast %cst_17 : f32 to vector<8x128xf32>
      %37 = arith.addf %36, %35 : vector<8x128xf32>
      %38 = tpu.reciprocal %37 {approx = true} : vector<8x128xf32> -> vector<8x128xf32>
      %c0_18 = arith.constant 0 : index
      %c0_19 = arith.constant 0 : index
      %39 = vector.load %arg6[%c0_18, %c0_19] : memref<8x128xf32, #tpu.memory_space<vmem>>, vector<8x128xf32>
      %40 = arith.mulf %29, %39 : vector<8x128xf32>
      %41 = arith.mulf %22, %31 : vector<8x128xf32>
      %42 = arith.addf %40, %41 : vector<8x128xf32>
      %43 = math.tanh %42 : vector<8x128xf32>
      %44 = arith.mulf %38, %43 : vector<8x128xf32>
      %c0_20 = arith.constant 0 : index
      %c0_21 = arith.constant 0 : index
      %45 = vector.load %arg8[%c0_20, %c0_21] : memref<8x128xf32, #tpu.memory_space<vmem>>, vector<8x128xf32>
      tpu.vector_store %arg8[%c0_20, %c0_21], %42 {strides = array<i32>} : memref<8x128xf32, #tpu.memory_space<vmem>>, vector<8x128xf32>,
      %c0_22 = arith.constant 0 : index
      %c0_23 = arith.constant 0 : index
      %46 = vector.load %arg7[%c0_22, %c0_23] : memref<8x128xf32, #tpu.memory_space<vmem>>, vector<8x128xf32>
      tpu.vector_store %arg7[%c0_22, %c0_23], %44 {strides = array<i32>} : memref<8x128xf32, #tpu.memory_space<vmem>>, vector<8x128xf32>,
    } else {
    }
    return
  }
  func.func @transform_0(%arg0: i32, %arg1: i32, %arg2: i32) -> (i32, i32) {
    %c0_i32 = arith.constant 0 : i32
    return %arg0, %arg2 : i32, i32
  }
  func.func @transform_1(%arg0: i32, %arg1: i32, %arg2: i32) -> (i32, i32) {
    %c0_i32 = arith.constant 0 : i32
    return %arg2, %arg1 : i32, i32
  }
  func.func @transform_2(%arg0: i32, %arg1: i32, %arg2: i32) -> (i32, i32) {
    %c0_i32 = arith.constant 0 : i32
    %c0_i32_0 = arith.constant 0 : i32
    return %c0_i32, %arg1 : i32, i32
  }
  func.func @transform_3(%arg0: i32, %arg1: i32, %arg2: i32) -> (i32, i32) {
    %c0_i32 = arith.constant 0 : i32
    return %arg0, %arg1 : i32, i32
  }
  func.func @transform_4(%arg0: i32, %arg1: i32, %arg2: i32) -> (i32, i32) {
    %c0_i32 = arith.constant 0 : i32
    return %arg0, %arg1 : i32, i32
  }
  func.func @transform_5(%arg0: i32, %arg1: i32, %arg2: i32) -> (i32, i32) {
    %c0_i32 = arith.constant 0 : i32
    return %arg0, %arg1 : i32, i32
  }
}

</mosaic_0001>

<llo_original>
// kernel: tpu_custom_call.1
$region0: #{tpu_custom_call.1}
  #allocation0 [shape = 'u32[]', space=smem, size = 0x4, offset = 0x4, fixed_abs, tag = 'smem constant byte address 0x4 - core index']
  #allocation1 [shape = 'u32[72,128]{1,0:T(1,128)}', space=vmem, size = 0x9000, scoped, tag = 'internal scratch']
  #allocation2 [shape = 'f32[8,512]{1,0:T(8,128)}', space=vmem, size = 0x4000, scoped, tag = 'scratch operand']
  %s0 = inlined_call_operand.hbm [shape: bf16[8,256], index: 0, kind: input, shape index: {}]
  %s1 = inlined_call_operand.hbm [shape: bf16[256,512], index: 1, kind: input, shape index: {}]
  %s2 = inlined_call_operand.hbm [shape: f32[1,512], index: 2, kind: input, shape index: {}]
  %s3 = inlined_call_operand.hbm [shape: f32[8,128], index: 3, kind: input, shape index: {}]
  %s4 = inlined_call_operand.hbm [shape: f32[8,128], index: 4, kind: output, shape index: {0}]
  %s5 = inlined_call_operand.hbm [shape: f32[8,128], index: 5, kind: output, shape index: {1}]
  %6 = xla_tuple %s4, %s5
  %s7 = sld [smem:[#allocation0]]
  $region62: #{tpu_custom_call.1} parent=0
    _
  %s9 = ssub.s32 1, %s7
  %s10 = scalar_select 0, %s9, %s7
  $region1: #{tpu_custom_call.1} parent=0
    #allocation3 [shape = 'u8[4096]{0}', space=vmem, size = 0x1000, scoped, tag = 'input window, operand 0, single buffered']
    #allocation4 [shape = 's32[1]{0}', space=sflag, size = 0x4, scoped, tag = 'scoped memory for tpu_custom_call.1']
    #allocation5 [shape = 's32[1]{0}', space=sflag, size = 0x4, scoped, tag = 'scoped memory for tpu_custom_call.1']
    #allocation6 [shape = 'u8[262144]{0}', space=vmem, size = 0x40000, scoped, tag = 'input window, operand 1, single buffered']
    #allocation7 [shape = 's32[1]{0}', space=sflag, size = 0x4, scoped, tag = 'scoped memory for tpu_custom_call.1']
    #allocation8 [shape = 'u8[2048]{0}', space=vmem, size = 0x800, scoped, tag = 'input window, operand 2, single buffered']
    #allocation9 [shape = 'u8[4096]{0}', space=vmem, size = 0x1000, scoped, tag = 'input window, operand 3, single buffered']
    #allocation10 [shape = 's32[1]{0}', space=sflag, size = 0x4, scoped, tag = 'scoped memory for tpu_custom_call.1']
    #allocation11 [shape = 'u8[4096]{0}', space=vmem, size = 0x1000, scoped, tag = 'output window, operand 0, single buffered']
    #allocation12 [shape = 'u8[4096]{0}', space=vmem, size = 0x1000, scoped, tag = 'output window, operand 1, single buffered']
    #allocation13 [shape = 's32[1]{0}', space=sflag, size = 0x4, scoped, tag = 'scoped memory for tpu_custom_call.1']
    %11 = vsyncpa [#allocation4], 0
    %12 = vsyncpa [#allocation7], 0
    %13 = vsyncpa [#allocation10], 0
    %14 = vsyncpa [#allocation5], 0
    %15 = vsyncpa [#allocation13], 0
    // Predicated region
    $region2: #{tpu_custom_call.1} parent=1 // pred_check
      _
    $region3: #{tpu_custom_call.1} parent=1 // pred_check_branch
      %17 = sbr.rel (0) target = $region5
    $region4: #{tpu_custom_call.1} parent=1 // pred_region
      %19 = vsyncadd [#allocation4], 0
      %s21 = sshll.u32 %s0, 4
      %s22 = int_to_ptr.hbm [resolvable:$true] %s21
      %s23 = sshll.u32 [#allocation3], 4
      %s24 = int_to_ptr.vmem [resolvable:$true] %s23
      %26 = dma.hbm_to_vmem [thread:$0]  %s22, 128, %s24, [#allocation4]
    $region5: #{tpu_custom_call.1} parent=1 // pred_fallthru
      _
    // Predicated region
    $region6: #{tpu_custom_call.1} parent=1 // pred_check
      _
    $region7: #{tpu_custom_call.1} parent=1 // pred_check_branch
      %28 = sbr.rel (0) target = $region9
    $region8: #{tpu_custom_call.1} parent=1 // pred_region
      %30 = vsyncadd [#allocation7], 0
      %s31 = sshll.u32 %s1, 4
      %s32 = int_to_ptr.hbm [resolvable:$true] %s31
      %s33 = sshll.u32 [#allocation6], 4
      %s34 = int_to_ptr.vmem [resolvable:$true] %s33
      %39 = dma.hbm_to_vmem [thread:$0]  %s32, 8192, %s34, [#allocation7], 256, 256, 16
    $region9: #{tpu_custom_call.1} parent=1 // pred_fallthru
      _
    // Predicated region
    $region10: #{tpu_custom_call.1} parent=1 // pred_check
      _
    $region11: #{tpu_custom_call.1} parent=1 // pred_check_branch
      %41 = sbr.rel (0) target = $region13
    $region12: #{tpu_custom_call.1} parent=1 // pred_region
      %43 = vsyncadd [#allocation7], 0
      %s45 = sshll.u32 %s2, 4
      %s46 = int_to_ptr.hbm [resolvable:$true] %s45
      %s47 = sshll.u32 [#allocation8], 4
      %s48 = int_to_ptr.vmem [resolvable:$true] %s47
      %50 = dma.hbm_to_vmem [thread:$0]  %s46, 64, %s48, [#allocation7]
    $region13: #{tpu_custom_call.1} parent=1 // pred_fallthru
      _
    // Predicated region
    $region14: #{tpu_custom_call.1} parent=1 // pred_check
      _
    $region15: #{tpu_custom_call.1} parent=1 // pred_check_branch
      %52 = sbr.rel (0) target = $region17
    $region16: #{tpu_custom_call.1} parent=1 // pred_region
      %54 = vsyncadd [#allocation10], 0
      %s56 = sshll.u32 %s3, 4
      %s57 = int_to_ptr.hbm [resolvable:$true] %s56
      %s58 = sshll.u32 [#allocation9], 4
      %s59 = int_to_ptr.vmem [resolvable:$true] %s58
      %61 = dma.hbm_to_vmem [thread:$0]  %s57, 128, %s59, [#allocation10]
    $region17: #{tpu_custom_call.1} parent=1 // pred_fallthru
      _
    // Predicated region
    $region18: #{tpu_custom_call.1} parent=1 // pred_check
      _
    $region19: #{tpu_custom_call.1} parent=1 // pred_check_branch
      %63 = sbr.rel (0) target = $region21
    $region20: #{tpu_custom_call.1} parent=1 // pred_region
      %65 = dma.done [#allocation4], 128
    $region21: #{tpu_custom_call.1} parent=1 // pred_fallthru
      _
    // Predicated region
    $region22: #{tpu_custom_call.1} parent=1 // pred_check
      _
    $region23: #{tpu_custom_call.1} parent=1 // pred_check_branch
      %67 = sbr.rel (0) target = $region25
    $region24: #{tpu_custom_call.1} parent=1 // pred_region
      %69 = dma.done [#allocation7], 8192
    $region25: #{tpu_custom_call.1} parent=1 // pred_fallthru
      _
    // Predicated region
    $region26: #{tpu_custom_call.1} parent=1 // pred_check
      _
    $region27: #{tpu_custom_call.1} parent=1 // pred_check_branch
      %71 = sbr.rel (0) target = $region29
    $region28: #{tpu_custom_call.1} parent=1 // pred_region
      %73 = dma.done [#allocation7], 64
    $region29: #{tpu_custom_call.1} parent=1 // pred_fallthru
      _
    // Predicated region
    $region30: #{tpu_custom_call.1} parent=1 // pred_check
      _
    $region31: #{tpu_custom_call.1} parent=1 // pred_check_branch
      %75 = sbr.rel (0) target = $region33
    $region32: #{tpu_custom_call.1} parent=1 // pred_region
      %77 = dma.done [#allocation10], 128
    $region33: #{tpu_custom_call.1} parent=1 // pred_fallthru
      _
    %v78 = vld [vmem:[#allocation3] sm:$0xff]
    %v79 = vld [vmem:[#allocation6] sm:$0xff]
    %v80 = vld [vmem:[#allocation6 + $0x8] sm:$0xff]
    %v81 = vld [vmem:[#allocation6 + $0x10] sm:$0xff]
    %v82 = vld [vmem:[#allocation6 + $0x18] sm:$0xff]
    %v83 = vld [vmem:[#allocation6 + $0x20] sm:$0xff]
    %v84 = vld [vmem:[#allocation6 + $0x28] sm:$0xff]
    %v85 = vld [vmem:[#allocation6 + $0x30] sm:$0xff]
    %v86 = vld [vmem:[#allocation6 + $0x38] sm:$0xff]
    %v87 = vld [vmem:[#allocation6 + $0x40] sm:$0xff]
    %v88 = vld [vmem:[#allocation6 + $0x48] sm:$0xff]
    %v89 = vld [vmem:[#allocation6 + $0x50] sm:$0xff]
    %v90 = vld [vmem:[#allocation6 + $0x58] sm:$0xff]
    %v91 = vld [vmem:[#allocation6 + $0x60] sm:$0xff]
    %v92 = vld [vmem:[#allocation6 + $0x68] sm:$0xff]
    %v93 = vld [vmem:[#allocation6 + $0x70] sm:$0xff]
    %v94 = vld [vmem:[#allocation6 + $0x78] sm:$0xff]
    %v95 = vld [vmem:[#allocation6 + $0x80] sm:$0xff]
    %v96 = vld [vmem:[#allocation6 + $0x88] sm:$0xff]
    %v97 = vld [vmem:[#allocation6 + $0x90] sm:$0xff]
    %v98 = vld [vmem:[#allocation6 + $0x98] sm:$0xff]
    %v99 = vld [vmem:[#allocation6 + $0xa0] sm:$0xff]
    %v100 = vld [vmem:[#allocation6 + $0xa8] sm:$0xff]
    %v101 = vld [vmem:[#allocation6 + $0xb0] sm:$0xff]
    %v102 = vld [vmem:[#allocation6 + $0xb8] sm:$0xff]
    %v103 = vld [vmem:[#allocation6 + $0xc0] sm:$0xff]
    %v104 = vld [vmem:[#allocation6 + $0xc8] sm:$0xff]
    %v105 = vld [vmem:[#allocation6 + $0xd0] sm:$0xff]
    %v106 = vld [vmem:[#allocation6 + $0xd8] sm:$0xff]
    %v107 = vld [vmem:[#allocation6 + $0xe0] sm:$0xff]
    %v108 = vld [vmem:[#allocation6 + $0xe8] sm:$0xff]
    %v109 = vld [vmem:[#allocation6 + $0xf0] sm:$0xff]
    %v110 = vld [vmem:[#allocation6 + $0xf8] sm:$0xff]
    %v111 = vld [vmem:[#allocation6 + $0x100] sm:$0xff]
    %v112 = vld [vmem:[#allocation6 + $0x108] sm:$0xff]
    %v113 = vld [vmem:[#allocation6 + $0x110] sm:$0xff]
    %v114 = vld [vmem:[#allocation6 + $0x118] sm:$0xff]
    %v115 = vld [vmem:[#allocation6 + $0x120] sm:$0xff]
    %v116 = vld [vmem:[#allocation6 + $0x128] sm:$0xff]
    %v117 = vld [vmem:[#allocation6 + $0x130] sm:$0xff]
    %v118 = vld [vmem:[#allocation6 + $0x138] sm:$0xff]
    %v119 = vld [vmem:[#allocation6 + $0x140] sm:$0xff]
    %v120 = vld [vmem:[#allocation6 + $0x148] sm:$0xff]
    %v121 = vld [vmem:[#allocation6 + $0x150] sm:$0xff]
    %v122 = vld [vmem:[#allocation6 + $0x158] sm:$0xff]
    %v123 = vld [vmem:[#allocation6 + $0x160] sm:$0xff]
    %v124 = vld [vmem:[#allocation6 + $0x168] sm:$0xff]
    %v125 = vld [vmem:[#allocation6 + $0x170] sm:$0xff]
    %v126 = vld [vmem:[#allocation6 + $0x178] sm:$0xff]
    %v127 = vld [vmem:[#allocation6 + $0x180] sm:$0xff]
    %v128 = vld [vmem:[#allocation6 + $0x188] sm:$0xff]
    %v129 = vld [vmem:[#allocation6 + $0x190] sm:$0xff]
    %v130 = vld [vmem:[#allocation6 + $0x198] sm:$0xff]
    %v131 = vld [vmem:[#allocation6 + $0x1a0] sm:$0xff]
    %v132 = vld [vmem:[#allocation6 + $0x1a8] sm:$0xff]
    %v133 = vld [vmem:[#allocation6 + $0x1b0] sm:$0xff]
    %v134 = vld [vmem:[#allocation6 + $0x1b8] sm:$0xff]
    %v135 = vld [vmem:[#allocation6 + $0x1c0] sm:$0xff]
    %v136 = vld [vmem:[#allocation6 + $0x1c8] sm:$0xff]
    %v137 = vld [vmem:[#allocation6 + $0x1d0] sm:$0xff]
    %v138 = vld [vmem:[#allocation6 + $0x1d8] sm:$0xff]
    %v139 = vld [vmem:[#allocation6 + $0x1e0] sm:$0xff]
    %v140 = vld [vmem:[#allocation6 + $0x1e8] sm:$0xff]
    %v141 = vld [vmem:[#allocation6 + $0x1f0] sm:$0xff]
    %v142 = vld [vmem:[#allocation6 + $0x1f8] sm:$0xff]
    %v144 = vunpack.c.l.b16 %v78
    %v145 = vunpack.c.h.b16 %v78
    %v146 = vpack.c.b16 %v144, %v144
    %v147 = vpack.c.b16 %v145, %v145
    %v214 = vunpack.c.l.b16 %v79
    %v215 = vunpack.c.h.b16 %v79
    %v216 = vunpack.c.l.b16 %v80
    %v217 = vunpack.c.h.b16 %v80
    %v218 = vunpack.c.l.b16 %v81
    %v219 = vunpack.c.h.b16 %v81
    %v220 = vunpack.c.l.b16 %v82
    %v221 = vunpack.c.h.b16 %v82
    %v222 = vunpack.c.l.b16 %v83
    %v223 = vunpack.c.h.b16 %v83
    %v224 = vunpack.c.l.b16 %v84
    %v225 = vunpack.c.h.b16 %v84
    %v226 = vunpack.c.l.b16 %v85
    %v227 = vunpack.c.h.b16 %v85
    %v228 = vunpack.c.l.b16 %v86
    %v229 = vunpack.c.h.b16 %v86
    %v230 = vunpack.c.l.b16 %v87
    %v231 = vunpack.c.h.b16 %v87
    %v232 = vunpack.c.l.b16 %v88
    %v233 = vunpack.c.h.b16 %v88
    %v234 = vunpack.c.l.b16 %v89
    %v235 = vunpack.c.h.b16 %v89
    %v236 = vunpack.c.l.b16 %v90
    %v237 = vunpack.c.h.b16 %v90
    %v238 = vunpack.c.l.b16 %v91
    %v239 = vunpack.c.h.b16 %v91
    %v240 = vunpack.c.l.b16 %v92
    %v241 = vunpack.c.h.b16 %v92
    %v242 = vunpack.c.l.b16 %v93
    %v243 = vunpack.c.h.b16 %v93
    %v244 = vunpack.c.l.b16 %v94
    %v245 = vunpack.c.h.b16 %v94
    %v246 = vunpack.c.l.b16 %v95
    %v247 = vunpack.c.h.b16 %v95
    %v248 = vunpack.c.l.b16 %v96
    %v249 = vunpack.c.h.b16 %v96
    %v250 = vunpack.c.l.b16 %v97
    %v251 = vunpack.c.h.b16 %v97
    %v252 = vunpack.c.l.b16 %v98
    %v253 = vunpack.c.h.b16 %v98
    %v254 = vunpack.c.l.b16 %v99
    %v255 = vunpack.c.h.b16 %v99
    %v256 = vunpack.c.l.b16 %v100
    %v257 = vunpack.c.h.b16 %v100
    %v258 = vunpack.c.l.b16 %v101
    %v259 = vunpack.c.h.b16 %v101
    %v260 = vunpack.c.l.b16 %v102
    %v261 = vunpack.c.h.b16 %v102
    %v262 = vunpack.c.l.b16 %v103
    %v263 = vunpack.c.h.b16 %v103
    %v264 = vunpack.c.l.b16 %v104
    %v265 = vunpack.c.h.b16 %v104
    %v266 = vunpack.c.l.b16 %v105
    %v267 = vunpack.c.h.b16 %v105
    %v268 = vunpack.c.l.b16 %v106
    %v269 = vunpack.c.h.b16 %v106
    %v270 = vunpack.c.l.b16 %v107
    %v271 = vunpack.c.h.b16 %v107
    %v272 = vunpack.c.l.b16 %v108
    %v273 = vunpack.c.h.b16 %v108
    %v274 = vunpack.c.l.b16 %v109
    %v275 = vunpack.c.h.b16 %v109
    %v276 = vunpack.c.l.b16 %v110
    %v277 = vunpack.c.h.b16 %v110
    %v278 = vunpack.c.l.b16 %v111
    %v279 = vunpack.c.h.b16 %v111
    %v280 = vunpack.c.l.b16 %v112
    %v281 = vunpack.c.h.b16 %v112
    %v282 = vunpack.c.l.b16 %v113
    %v283 = vunpack.c.h.b16 %v113
    %v284 = vunpack.c.l.b16 %v114
    %v285 = vunpack.c.h.b16 %v114
    %v286 = vunpack.c.l.b16 %v115
    %v287 = vunpack.c.h.b16 %v115
    %v288 = vunpack.c.l.b16 %v116
    %v289 = vunpack.c.h.b16 %v116
    %v290 = vunpack.c.l.b16 %v117
    %v291 = vunpack.c.h.b16 %v117
    %v292 = vunpack.c.l.b16 %v118
    %v293 = vunpack.c.h.b16 %v118
    %v294 = vunpack.c.l.b16 %v119
    %v295 = vunpack.c.h.b16 %v119
    %v296 = vunpack.c.l.b16 %v120
    %v297 = vunpack.c.h.b16 %v120
    %v298 = vunpack.c.l.b16 %v121
    %v299 = vunpack.c.h.b16 %v121
    %v300 = vunpack.c.l.b16 %v122
    %v301 = vunpack.c.h.b16 %v122
    %v302 = vunpack.c.l.b16 %v123
    %v303 = vunpack.c.h.b16 %v123
    %v304 = vunpack.c.l.b16 %v124
    %v305 = vunpack.c.h.b16 %v124
    %v306 = vunpack.c.l.b16 %v125
    %v307 = vunpack.c.h.b16 %v125
    %v308 = vunpack.c.l.b16 %v126
    %v309 = vunpack.c.h.b16 %v126
    %v310 = vunpack.c.l.b16 %v127
    %v311 = vunpack.c.h.b16 %v127
    %v312 = vunpack.c.l.b16 %v128
    %v313 = vunpack.c.h.b16 %v128
    %v314 = vunpack.c.l.b16 %v129
    %v315 = vunpack.c.h.b16 %v129
    %v316 = vunpack.c.l.b16 %v130
    %v317 = vunpack.c.h.b16 %v130
    %v318 = vunpack.c.l.b16 %v131
    %v319 = vunpack.c.h.b16 %v131
    %v320 = vunpack.c.l.b16 %v132
    %v321 = vunpack.c.h.b16 %v132
    %v322 = vunpack.c.l.b16 %v133
    %v323 = vunpack.c.h.b16 %v133
    %v324 = vunpack.c.l.b16 %v134
    %v325 = vunpack.c.h.b16 %v134
    %v326 = vunpack.c.l.b16 %v135
    %v327 = vunpack.c.h.b16 %v135
    %v328 = vunpack.c.l.b16 %v136
    %v329 = vunpack.c.h.b16 %v136
    %v330 = vunpack.c.l.b16 %v137
    %v331 = vunpack.c.h.b16 %v137
    %v332 = vunpack.c.l.b16 %v138
    %v333 = vunpack.c.h.b16 %v138
    %v334 = vunpack.c.l.b16 %v139
    %v335 = vunpack.c.h.b16 %v139
    %v336 = vunpack.c.l.b16 %v140
    %v337 = vunpack.c.h.b16 %v140
    %v338 = vunpack.c.l.b16 %v141
    %v339 = vunpack.c.h.b16 %v141
    %v340 = vunpack.c.l.b16 %v142
    %v341 = vunpack.c.h.b16 %v142
    %v342 = vpack.c.b16 %v218, %v214
    %v343 = vpack.c.b16 %v219, %v215
    %v344 = vpack.c.b16 %v220, %v216
    %v345 = vpack.c.b16 %v221, %v217
    %v346 = vpack.c.b16 %v226, %v222
    %v347 = vpack.c.b16 %v227, %v223
    %v348 = vpack.c.b16 %v228, %v224
    %v349 = vpack.c.b16 %v229, %v225
    %v350 = vpack.c.b16 %v234, %v230
    %v351 = vpack.c.b16 %v235, %v231
    %v352 = vpack.c.b16 %v236, %v232
    %v353 = vpack.c.b16 %v237, %v233
    %v354 = vpack.c.b16 %v242, %v238
    %v355 = vpack.c.b16 %v243, %v239
    %v356 = vpack.c.b16 %v244, %v240
    %v357 = vpack.c.b16 %v245, %v241
    %v358 = vpack.c.b16 %v250, %v246
    %v359 = vpack.c.b16 %v251, %v247
    %v360 = vpack.c.b16 %v252, %v248
    %v361 = vpack.c.b16 %v253, %v249
    %v362 = vpack.c.b16 %v258, %v254
    %v363 = vpack.c.b16 %v259, %v255
    %v364 = vpack.c.b16 %v260, %v256
    %v365 = vpack.c.b16 %v261, %v257
    %v366 = vpack.c.b16 %v266, %v262
    %v367 = vpack.c.b16 %v267, %v263
    %v368 = vpack.c.b16 %v268, %v264
    %v369 = vpack.c.b16 %v269, %v265
    %v370 = vpack.c.b16 %v274, %v270
    %v371 = vpack.c.b16 %v275, %v271
    %v372 = vpack.c.b16 %v276, %v272
    %v373 = vpack.c.b16 %v277, %v273
    %v374 = vpack.c.b16 %v282, %v278
    %v375 = vpack.c.b16 %v283, %v279
    %v376 = vpack.c.b16 %v284, %v280
    %v377 = vpack.c.b16 %v285, %v281
    %v378 = vpack.c.b16 %v290, %v286
    %v379 = vpack.c.b16 %v291, %v287
    %v380 = vpack.c.b16 %v292, %v288
    %v381 = vpack.c.b16 %v293, %v289
    %v382 = vpack.c.b16 %v298, %v294
    %v383 = vpack.c.b16 %v299, %v295
    %v384 = vpack.c.b16 %v300, %v296
    %v385 = vpack.c.b16 %v301, %v297
    %v386 = vpack.c.b16 %v306, %v302
    %v387 = vpack.c.b16 %v307, %v303
    %v388 = vpack.c.b16 %v308, %v304
    %v389 = vpack.c.b16 %v309, %v305
    %v390 = vpack.c.b16 %v314, %v310
    %v391 = vpack.c.b16 %v315, %v311
    %v392 = vpack.c.b16 %v316, %v312
    %v393 = vpack.c.b16 %v317, %v313
    %v394 = vpack.c.b16 %v322, %v318
    %v395 = vpack.c.b16 %v323, %v319
    %v396 = vpack.c.b16 %v324, %v320
    %v397 = vpack.c.b16 %v325, %v321
    %v398 = vpack.c.b16 %v330, %v326
    %v399 = vpack.c.b16 %v331, %v327
    %v400 = vpack.c.b16 %v332, %v328
    %v401 = vpack.c.b16 %v333, %v329
    %v402 = vpack.c.b16 %v338, %v334
    %v403 = vpack.c.b16 %v339, %v335
    %v404 = vpack.c.b16 %v340, %v336
    %v405 = vpack.c.b16 %v341, %v337
    %470 = vmatpush.bf16.msra.mxu0 %v370
    %471 = vmatpush.bf16.msra.mxu0 %v366
    %472 = vmatpush.bf16.msra.mxu0 %v362
    %473 = vmatpush.bf16.msra.mxu0 %v358
    %474 = vmatpush.bf16.msra.mxu0 %v354
    %475 = vmatpush.bf16.msra.mxu0 %v350
    %476 = vmatpush.bf16.msra.mxu0 %v346
    %477 = vmatpush.bf16.msra.mxu0 %v342
    %478 = vmatmul.bf16.gmra.mxu0 %v146
    %v479 = vpop.f32.mrf.mxu0
    %v480 = vadd.f32 0.0, %v479
    %v481 = vpop.f32.mrf.mxu0
    %482 = vdwg.mxu0
    %483 = vmatpush.bf16.msra.mxu0 %v402
    %484 = vmatpush.bf16.msra.mxu0 %v398
    %485 = vmatpush.bf16.msra.mxu0 %v394
    %486 = vmatpush.bf16.msra.mxu0 %v390
    %487 = vmatpush.bf16.msra.mxu0 %v386
    %488 = vmatpush.bf16.msra.mxu0 %v382
    %489 = vmatpush.bf16.msra.mxu0 %v378
    %490 = vmatpush.bf16.msra.mxu0 %v374
    %491 = vmatmul.bf16.gmra.mxu0 %v147
    %v492 = vpop.f32.mrf.mxu0
    %v493 = vadd.f32 %v480, %v492
    %v494 = vpop.f32.mrf.mxu0
    %495 = vdwg.mxu0
    %496 = vmatpush.bf16.msra.mxu0 %v371
    %497 = vmatpush.bf16.msra.mxu0 %v367
    %498 = vmatpush.bf16.msra.mxu0 %v363
    %499 = vmatpush.bf16.msra.mxu0 %v359
    %500 = vmatpush.bf16.msra.mxu0 %v355
    %501 = vmatpush.bf16.msra.mxu0 %v351
    %502 = vmatpush.bf16.msra.mxu0 %v347
    %503 = vmatpush.bf16.msra.mxu0 %v343
    %504 = vmatmul.bf16.gmra.mxu0 %v146
    %v505 = vpop.f32.mrf.mxu0
    %v506 = vadd.f32 0.0, %v505
    %v507 = vpop.f32.mrf.mxu0
    %508 = vdwg.mxu0
    %509 = vmatpush.bf16.msra.mxu0 %v403
    %510 = vmatpush.bf16.msra.mxu0 %v399
    %511 = vmatpush.bf16.msra.mxu0 %v395
    %512 = vmatpush.bf16.msra.mxu0 %v391
    %513 = vmatpush.bf16.msra.mxu0 %v387
    %514 = vmatpush.bf16.msra.mxu0 %v383
    %515 = vmatpush.bf16.msra.mxu0 %v379
    %516 = vmatpush.bf16.msra.mxu0 %v375
    %517 = vmatmul.bf16.gmra.mxu0 %v147
    %v518 = vpop.f32.mrf.mxu0
    %v519 = vadd.f32 %v506, %v518
    %v520 = vpop.f32.mrf.mxu0
    %521 = vdwg.mxu0
    %522 = vmatpush.bf16.msra.mxu0 %v372
    %523 = vmatpush.bf16.msra.mxu0 %v368
    %524 = vmatpush.bf16.msra.mxu0 %v364
    %525 = vmatpush.bf16.msra.mxu0 %v360
    %526 = vmatpush.bf16.msra.mxu0 %v356
    %527 = vmatpush.bf16.msra.mxu0 %v352
    %528 = vmatpush.bf16.msra.mxu0 %v348
    %529 = vmatpush.bf16.msra.mxu0 %v344
    %530 = vmatmul.bf16.gmra.mxu0 %v146
    %v531 = vpop.f32.mrf.mxu0
    %v532 = vadd.f32 0.0, %v531
    %v533 = vpop.f32.mrf.mxu0
    %534 = vdwg.mxu0
    %535 = vmatpush.bf16.msra.mxu0 %v404
    %536 = vmatpush.bf16.msra.mxu0 %v400
    %537 = vmatpush.bf16.msra.mxu0 %v396
    %538 = vmatpush.bf16.msra.mxu0 %v392
    %539 = vmatpush.bf16.msra.mxu0 %v388
    %540 = vmatpush.bf16.msra.mxu0 %v384
    %541 = vmatpush.bf16.msra.mxu0 %v380
    %542 = vmatpush.bf16.msra.mxu0 %v376
    %543 = vmatmul.bf16.gmra.mxu0 %v147
    %v544 = vpop.f32.mrf.mxu0
    %v545 = vadd.f32 %v532, %v544
    %v546 = vpop.f32.mrf.mxu0
    %547 = vdwg.mxu0
    %548 = vmatpush.bf16.msra.mxu0 %v373
    %549 = vmatpush.bf16.msra.mxu0 %v369
    %550 = vmatpush.bf16.msra.mxu0 %v365
    %551 = vmatpush.bf16.msra.mxu0 %v361
    %552 = vmatpush.bf16.msra.mxu0 %v357
    %553 = vmatpush.bf16.msra.mxu0 %v353
    %554 = vmatpush.bf16.msra.mxu0 %v349
    %555 = vmatpush.bf16.msra.mxu0 %v345
    %556 = vmatmul.bf16.gmra.mxu0 %v146
    %v557 = vpop.f32.mrf.mxu0
    %v558 = vadd.f32 0.0, %v557
    %v559 = vpop.f32.mrf.mxu0
    %560 = vdwg.mxu0
    %561 = vmatpush.bf16.msra.mxu0 %v405
    %562 = vmatpush.bf16.msra.mxu0 %v401
    %563 = vmatpush.bf16.msra.mxu0 %v397
    %564 = vmatpush.bf16.msra.mxu0 %v393
    %565 = vmatpush.bf16.msra.mxu0 %v389
    %566 = vmatpush.bf16.msra.mxu0 %v385
    %567 = vmatpush.bf16.msra.mxu0 %v381
    %568 = vmatpush.bf16.msra.mxu0 %v377
    %569 = vmatmul.bf16.gmra.mxu0 %v147
    %v570 = vpop.f32.mrf.mxu0
    %v571 = vadd.f32 %v558, %v570
    %v572 = vpop.f32.mrf.mxu0
    %573 = vdwg.mxu0
    %p574 = scmp.eq.s32.totalorder 0, 0
    // Predicated region
    $region34: #{tpu_custom_call.1} parent=1 // pred_check
      %p575 = pneg %p574
    $region35: #{tpu_custom_call.1} parent=1 // pred_check_branch
      %577 = sbr.rel (%p575) target = $region37
    $region36: #{tpu_custom_call.1} parent=1 // pred_region
      %578 = vst [vmem:[#allocation2] sm:$0xff] %v493
      %579 = vst [vmem:[#allocation2 + $0x8] sm:$0xff] %v519
      %580 = vst [vmem:[#allocation2 + $0x10] sm:$0xff] %v545
      %581 = vst [vmem:[#allocation2 + $0x18] sm:$0xff] %v571
    $region37: #{tpu_custom_call.1} parent=1 // pred_fallthru
      _
    %p582 = scmp.gt.s32.totalorder 0, 0
    // Predicated region
    $region38: #{tpu_custom_call.1} parent=1 // pred_check
      %p583 = pneg %p582
    $region39: #{tpu_custom_call.1} parent=1 // pred_check_branch
      %585 = sbr.rel (%p583) target = $region41
    $region40: #{tpu_custom_call.1} parent=1 // pred_region
      %v586 = vld [vmem:[#allocation2] sm:$0xff]
      %v587 = vld [vmem:[#allocation2 + $0x8] sm:$0xff]
      %v588 = vld [vmem:[#allocation2 + $0x10] sm:$0xff]
      %v589 = vld [vmem:[#allocation2 + $0x18] sm:$0xff]
      %v590 = vadd.f32 %v586, %v493
      %v591 = vadd.f32 %v587, %v519
      %v592 = vadd.f32 %v588, %v545
      %v593 = vadd.f32 %v589, %v571
      %594 = vst [vmem:[#allocation2] sm:$0xff] %v590
      %595 = vst [vmem:[#allocation2 + $0x8] sm:$0xff] %v591
      %596 = vst [vmem:[#allocation2 + $0x10] sm:$0xff] %v592
      %597 = vst [vmem:[#allocation2 + $0x18] sm:$0xff] %v593
    $region41: #{tpu_custom_call.1} parent=1 // pred_fallthru
      _
    // Predicated region
    $region42: #{tpu_custom_call.1} parent=1 // pred_check
      %p598 = pneg %p574
    $region43: #{tpu_custom_call.1} parent=1 // pred_check_branch
      %600 = sbr.rel (%p598) target = $region45
    $region44: #{tpu_custom_call.1} parent=1 // pred_region
      %v601 = vld [vmem:[#allocation2] sm:$0xff]
      %v602 = vld [vmem:[#allocation2 + $0x8] sm:$0xff]
      %v603 = vld [vmem:[#allocation2 + $0x10] sm:$0xff]
      %v604 = vld [vmem:[#allocation2 + $0x18] sm:$0xff]
      %v605 = vld [vmem:[#allocation8] sm:$0xf]
      %v607 = vperm.slane %v605, 0
      %v608 = vperm.slane %v605, 1
      %v609 = vperm.slane %v605, 2
      %v610 = vperm.slane %v605, 3
      %v615 = vadd.f32 %v601, %v607
      %v616 = vadd.f32 %v602, %v608
      %v617 = vadd.f32 %v603, %v609
      %v618 = vadd.f32 %v604, %v610
      %v619 = vsub.f32 0.0, %v615
      %v620 = vmul.f32 %v619, 1.442695
      %v621 = vpow.pop %v620
      %v622 = vadd.f32 %v621, 1.0
      %v623 = vrcp.pop %v622
      %v624 = vsub.f32 0.0, %v616
      %v625 = vmul.f32 %v624, 1.442695
      %v626 = vpow.pop %v625
      %v627 = vadd.f32 %v626, 1.0
      %v628 = vrcp.pop %v627
      %v629 = vtanh.pop %v617
      %v630 = vsub.f32 0.0, %v618
      %v631 = vmul.f32 %v630, 1.442695
      %v632 = vpow.pop %v631
      %v633 = vadd.f32 %v632, 1.0
      %v634 = vrcp.pop %v633
      %v635 = vld [vmem:[#allocation9] sm:$0xff]
      %v636 = vmul.f32 %v628, %v635
      %v637 = vmul.f32 %v623, %v629
      %v638 = vadd.f32 %v636, %v637
      %v639 = vtanh.pop %v638
      %v640 = vmul.f32 %v634, %v639
      %641 = vst [vmem:[#allocation12] sm:$0xff] %v638
      %642 = vst [vmem:[#allocation11] sm:$0xff] %v640
    $region45: #{tpu_custom_call.1} parent=1 // pred_fallthru
      _
    // Predicated region
    $region46: #{tpu_custom_call.1} parent=1 // pred_check
      _
    $region47: #{tpu_custom_call.1} parent=1 // pred_check_branch
      %644 = sbr.rel (0) target = $region49
    $region48: #{tpu_custom_call.1} parent=1 // pred_region
      %646 = vsyncadd [#allocation5], 0
      %s648 = sshll.u32 [#allocation11], 4
      %s649 = int_to_ptr.vmem [resolvable:$true] %s648
      %s650 = sshll.u32 %s4, 4
      %s651 = int_to_ptr.hbm [resolvable:$true] %s650
      %653 = dma.vmem_to_hbm [thread:$0]  %s649, 128, %s651, [#allocation5]
    $region49: #{tpu_custom_call.1} parent=1 // pred_fallthru
      _
    // Predicated region
    $region50: #{tpu_custom_call.1} parent=1 // pred_check
      _
    $region51: #{tpu_custom_call.1} parent=1 // pred_check_branch
      %655 = sbr.rel (0) target = $region53
    $region52: #{tpu_custom_call.1} parent=1 // pred_region
      %657 = vsyncadd [#allocation13], 0
      %s659 = sshll.u32 [#allocation12], 4
      %s660 = int_to_ptr.vmem [resolvable:$true] %s659
      %s661 = sshll.u32 %s5, 4
      %s662 = int_to_ptr.hbm [resolvable:$true] %s661
      %664 = dma.vmem_to_hbm [thread:$0]  %s660, 128, %s662, [#allocation13]
    $region53: #{tpu_custom_call.1} parent=1 // pred_fallthru
      _
    // Predicated region
    $region54: #{tpu_custom_call.1} parent=1 // pred_check
      _
    $region55: #{tpu_custom_call.1} parent=1 // pred_check_branch
      %666 = sbr.rel (0) target = $region57
    $region56: #{tpu_custom_call.1} parent=1 // pred_region
      %668 = dma.done [#allocation5], 128
    $region57: #{tpu_custom_call.1} parent=1 // pred_fallthru
      _
    // Predicated region
    $region58: #{tpu_custom_call.1} parent=1 // pred_check
      _
    $region59: #{tpu_custom_call.1} parent=1 // pred_check_branch
      %670 = sbr.rel (0) target = $region61
    $region60: #{tpu_custom_call.1} parent=1 // pred_region
      %672 = dma.done [#allocation13], 128
    $region61: #{tpu_custom_call.1} parent=1 // pred_fallthru
      _
    %673 = vsyncpa [#allocation4], 1
    %674 = vsyncpa [#allocation7], 1
    %675 = vsyncpa [#allocation10], 1
    %676 = vsyncpa [#allocation5], 1
    %677 = vsyncpa [#allocation13], 1

</llo_original>
